<compile_context>
chip_gen: v5e
topology: v5e:2x2
jax: 0.10.0
libtpu: 0.0.40
codegen_flags: <defaults>
</compile_context>

<pallas_src>
import functools

import numpy as np

import jax
import jax.numpy as jnp
from jax.experimental import pallas as pl
from jax.experimental.pallas import tpu as pltpu


def _round_up(a, m):
    return ((a + m - 1) // m) * m


# ----------------------------------------------------------------------------- kernels
def _am_softmax_kernel_single_k(x_ref, w_ref, rs_ref, cs_ref, o_ref):
    """Grid = (B/tm, C/tn); whole feature dim resident -> one MXU pass + fused scale."""
    acc = jnp.dot(x_ref[...], w_ref[...], preferred_element_type=jnp.float32)
    o_ref[...] = acc * rs_ref[...] * cs_ref[...]


def _am_softmax_kernel_multi_k(x_ref, w_ref, rs_ref, cs_ref, o_ref):
    """Grid = (B/tm, C/tn, F/tk); k innermost.  The f32 output tile is the accumulator."""
    k = pl.program_id(2)

    @pl.when(k == 0)
    def _init():
        o_ref[...] = jnp.zeros_like(o_ref)

    o_ref[...] += jnp.dot(x_ref[...], w_ref[...], preferred_element_type=jnp.float32)

    @pl.when(k == pl.num_programs(2) - 1)
    def _finalize():
        o_ref[...] *= rs_ref[...] * cs_ref[...]


# ----------------------------------------------------------------------------- wrapper
@functools.partial(jax.jit, static_argnames=("operand_dtype", "tm", "tn", "tk"))
def _am_softmax_call(x, W, s, *, operand_dtype, tm, tn, tk):
    B, F = x.shape
    _, C = W.shape

    Bp = _round_up(B, tm)
    Cp = _round_up(C, tn)
    Fp = _round_up(F, tk)

    # Inverse norms computed once, in f32, on the un-padded operands.
    # clamp(sumsq, 1e-24) == clamp(norm, 1e-12); the AM-softmax scale s is folded
    # into the row term so the kernel epilogue is a single broadcast multiply.
    xf = x.astype(jnp.float32)
    wf = W.astype(jnp.float32)
    row_scale = s * jax.lax.rsqrt(
        jnp.maximum(jnp.sum(xf * xf, axis=1, keepdims=True), 1e-24))     # (B, 1)
    col_scale = jax.lax.rsqrt(
        jnp.maximum(jnp.sum(wf * wf, axis=0, keepdims=True), 1e-24))     # (1, C)

    # MXU operands (bf16 by default).  Pad only when a dim is not tile-aligned;
    # zero padding adds 0 to the dot product (norms are already computed), and padded
    # batch rows / class columns are sliced away below.
    xo = x.astype(operand_dtype)
    wo = W.astype(operand_dtype)
    if (Bp, Fp) != (B, F):
        xo = jnp.pad(xo, ((0, Bp - B), (0, Fp - F)))
    if (Fp, Cp) != (F, C):
        wo = jnp.pad(wo, ((0, Fp - F), (0, Cp - C)))
    if Bp != B:
        row_scale = jnp.pad(row_scale, ((0, Bp - B), (0, 0)))
    if Cp != C:
        col_scale = jnp.pad(col_scale, ((0, 0), (0, Cp - C)))

    gi, gj, gk = Bp // tm, Cp // tn, Fp // tk

    if gk == 1:
        kernel = _am_softmax_kernel_single_k
        grid = (gi, gj)
        in_specs = [
            pl.BlockSpec((tm, tk), lambda i, j: (i, 0)),   # x tile (full feature dim)
            pl.BlockSpec((tk, tn), lambda i, j: (0, j)),   # W tile
            pl.BlockSpec((tm, 1), lambda i, j: (i, 0)),    # s * 1/||x_row||
            pl.BlockSpec((1, tn), lambda i, j: (0, j)),    # 1/||w_col||
        ]
        out_specs = pl.BlockSpec((tm, tn), lambda i, j: (i, j))
        dim_sem = ("parallel", "parallel")
    else:
        kernel = _am_softmax_kernel_multi_k
        grid = (gi, gj, gk)
        in_specs = [
            pl.BlockSpec((tm, tk), lambda i, j, k: (i, k)),
            pl.BlockSpec((tk, tn), lambda i, j, k: (k, j)),
            pl.BlockSpec((tm, 1), lambda i, j, k: (i, 0)),
            pl.BlockSpec((1, tn), lambda i, j, k: (0, j)),
        ]
        out_specs = pl.BlockSpec((tm, tn), lambda i, j, k: (i, j))
        dim_sem = ("parallel", "parallel", "arbitrary")

    out = pl.pallas_call(
        kernel,
        out_shape=jax.ShapeDtypeStruct((Bp, Cp), jnp.float32),
        grid=grid,
        in_specs=in_specs,
        out_specs=out_specs,
        compiler_params=pltpu.CompilerParams(
            dimension_semantics=dim_sem,
            # Double-buffered bf16 working set at the max default tiles is ~25 MiB;
            # 48 MiB leaves headroom on v7x (64 MiB physical) and is far under
            # v5e/v6e's 128 MiB.
            vmem_limit_bytes=48 * 1024 * 1024,
        ),
    )(xo, wo, row_scale, col_scale)

    return out[:B, :C]


def am_softmax_layer(x, W, s=30.0, *, operand_dtype=jnp.bfloat16,
                     tm=None, tn=None, tk=None):
    """x: (B, in_feats), W: (in_feats, n_classes) -> (B, n_classes) float32."""
    B, F = x.shape
    F2, C = W.shape
    assert F == F2, "in_feats mismatch"

    if tm is None:
        # Small batch (the common AM-softmax case) -> single i block, so W streams
        # from HBM exactly once.
        tm = min(256, _round_up(B, 8))
    if tn is None:
        # Lane-dense output tiles, large to cut grid-step overhead / x re-reads.
        tn = min(2048, _round_up(C, 128))
    if tk is None:
        # Collapse the reduction axis whenever the (8-aligned) feature dim fits one
        # block; otherwise tile K with a 512-wide MXU-friendly block.
        Fa = _round_up(F, 8)
        tk = Fa if Fa <= 2048 else 512

    return _am_softmax_call(x, W, jnp.float32(s),
                            operand_dtype=operand_dtype, tm=tm, tn=tn, tk=tk)


# ----------------------------------------------------------------------------- references
def am_softmax_ref(x, W, s=30.0):
    """Exact (float64, host) reference matching the PyTorch forward."""
    x = np.asarray(x, dtype=np.float64)
    W = np.asarray(W, dtype=np.float64)
    xn = x / np.maximum(np.linalg.norm(x, axis=1, keepdims=True), 1e-12)
    wn = W / np.maximum(np.linalg.norm(W, axis=0, keepdims=True), 1e-12)
    return (xn @ wn) * s


def am_softmax_ref_bf16_operands(x, W, s=30.0):
    """Reference that emulates the kernel's bf16-operand / f32-scale arithmetic."""
    xq = np.asarray(x.astype(jnp.bfloat16).astype(jnp.float32), dtype=np.float64)
    wq = np.asarray(W.astype(jnp.bfloat16).astype(jnp.float32), dtype=np.float64)
    xf = np.asarray(x, dtype=np.float64)
    wf = np.asarray(W, dtype=np.float64)
    rs = s / np.maximum(np.linalg.norm(xf, axis=1, keepdims=True), 1e-12)
    cs = 1.0 / np.maximum(np.linalg.norm(wf, axis=0, keepdims=True), 1e-12)
    return (xq @ wq) * rs * cs


# ----------------------------------------------------------------------------- self-test
if __name__ == "__main__":
    s = 30.0
    key = jax.random.PRNGKey(0)

    # ---- Case 1: module-typical shape, single K block (2D grid path). -------------
    B, in_feats, n_classes = 8, 32, 128
    kx, kw = jax.random.split(key)
    x = jax.random.normal(kx, (B, in_feats), dtype=jnp.float32)
    # Deterministic xavier_normal_ init (gain=1): std = sqrt(2 / (fan_in + fan_out)).
    xavier_std = (2.0 / (in_feats + n_classes)) ** 0.5
    W = jax.random.normal(kw, (in_feats, n_classes), dtype=jnp.float32) * xavier_std

    out = jax.block_until_ready(am_softmax_layer(x, W, s=s))
    assert out.shape == (B, n_classes)
    out_np = np.asarray(out)
    # Tight check vs. a reference using the same bf16 operand quantization.
    assert np.allclose(out_np, am_softmax_ref_bf16_operands(x, W, s=s), atol=1e-2), \
        "bf16-emulated reference mismatch (case 1)"
    # Loose check vs. the exact f64 reference (bound: 2*2^-8 * s ≈ 0.23 worst case).
    assert np.allclose(out_np, am_softmax_ref(x, W, s=s), atol=0.3), \
        "exact reference mismatch (case 1)"

    # ---- Case 2: larger feature dim with explicit K tiling (3D grid path). --------
    B2, F2c, C2 = 8, 640, 256
    kx2, kw2 = jax.random.split(jax.random.PRNGKey(1))
    x2 = jax.random.normal(kx2, (B2, F2c), dtype=jnp.float32)
    W2 = jax.random.normal(kw2, (F2c, C2), dtype=jnp.float32) * (2.0 / (F2c + C2)) ** 0.5

    out2 = jax.block_until_ready(am_softmax_layer(x2, W2, s=s, tk=128))
    assert out2.shape == (B2, C2)
    out2_np = np.asarray(out2)
    assert np.allclose(out2_np, am_softmax_ref_bf16_operands(x2, W2, s=s), atol=1e-2), \
        "bf16-emulated reference mismatch (case 2)"
    assert np.allclose(out2_np, am_softmax_ref(x2, W2, s=s), atol=0.3), \
        "exact reference mismatch (case 2)"

    print("KERNEL_OK")
</pallas_src>

<mosaic_0001>
module attributes {stable_mosaic.version = 11 : i64} {
  func.func @_am_softmax_kernel_single_k(%arg0: i32, %arg1: i32, %arg2: memref<8x32xbf16, #tpu.memory_space<vmem>>, %arg3: memref<32x128xbf16, #tpu.memory_space<vmem>>, %arg4: memref<8x1xf32, #tpu.memory_space<vmem>>, %arg5: memref<1x128xf32, #tpu.memory_space<vmem>>, %arg6: memref<8x128xf32, #tpu.memory_space<vmem>>) attributes {dimension_semantics = [#tpu.dimension_semantics<parallel>, #tpu.dimension_semantics<parallel>], iteration_bounds = array<i64: 1, 1>, scalar_prefetch = 0 : i64, scratch_operands = 0 : i64, tpu.core_type = #tpu.core_type<tc>, window_params = [{transform_indices = @transform_0, window_bounds = array<i64: 8, 32>}, {transform_indices = @transform_1, window_bounds = array<i64: 32, 128>}, {transform_indices = @transform_2, window_bounds = array<i64: 8, 1>}, {transform_indices = @transform_3, window_bounds = array<i64: 1, 128>}, {transform_indices = @transform_4, window_bounds = array<i64: 8, 128>}]} {
    %c0 = arith.constant 0 : index
    %c0_0 = arith.constant 0 : index
    %0 = vector.load %arg2[%c0, %c0_0] : memref<8x32xbf16, #tpu.memory_space<vmem>>, vector<8x32xbf16>
    %c0_1 = arith.constant 0 : index
    %c0_2 = arith.constant 0 : index
    %1 = vector.load %arg3[%c0_1, %c0_2] : memref<32x128xbf16, #tpu.memory_space<vmem>>, vector<32x128xbf16>
    %cst = arith.constant dense<0.000000e+00> : vector<8x128xf32>
    %2 = tpu.matmul %0, %1, %cst {dimension_numbers = #tpu.dot_dimension_numbers<[1], [0], [0], [1], [0, 0, 1, 1], [], []>} : vector<8x32xbf16>, vector<32x128xbf16>, vector<8x128xf32> -> vector<8x128xf32>
    %c0_3 = arith.constant 0 : index
    %c0_4 = arith.constant 0 : index
    %3 = vector.load %arg4[%c0_3, %c0_4] : memref<8x1xf32, #tpu.memory_space<vmem>>, vector<8x1xf32>
    %4 = vector.broadcast %3 : vector<8x1xf32> to vector<8x128xf32>
    %5 = arith.mulf %2, %4 : vector<8x128xf32>
    %c0_5 = arith.constant 0 : index
    %c0_6 = arith.constant 0 : index
    %6 = vector.load %arg5[%c0_5, %c0_6] : memref<1x128xf32, #tpu.memory_space<vmem>>, vector<1x128xf32>
    %7 = vector.broadcast %6 : vector<1x128xf32> to vector<8x128xf32>
    %8 = arith.mulf %5, %7 : vector<8x128xf32>
    %c0_7 = arith.constant 0 : index
    %c0_8 = arith.constant 0 : index
    %9 = vector.load %arg6[%c0_7, %c0_8] : memref<8x128xf32, #tpu.memory_space<vmem>>, vector<8x128xf32>
    tpu.vector_store %arg6[%c0_7, %c0_8], %8 {strides = array<i32>} : memref<8x128xf32, #tpu.memory_space<vmem>>, vector<8x128xf32>,
    return
  }
  func.func @transform_0(%arg0: i32, %arg1: i32) -> (i32, i32) {
    %c0_i32 = arith.constant 0 : i32
    %c0_i32_0 = arith.constant 0 : i32
    return %arg0, %c0_i32 : i32, i32
  }
  func.func @transform_1(%arg0: i32, %arg1: i32) -> (i32, i32) {
    %c0_i32 = arith.constant 0 : i32
    %c0_i32_0 = arith.constant 0 : i32
    return %c0_i32, %arg1 : i32, i32
  }
  func.func @transform_2(%arg0: i32, %arg1: i32) -> (i32, i32) {
    %c0_i32 = arith.constant 0 : i32
    %c0_i32_0 = arith.constant 0 : i32
    return %arg0, %c0_i32 : i32, i32
  }
  func.func @transform_3(%arg0: i32, %arg1: i32) -> (i32, i32) {
    %c0_i32 = arith.constant 0 : i32
    %c0_i32_0 = arith.constant 0 : i32
    return %c0_i32, %arg1 : i32, i32
  }
  func.func @transform_4(%arg0: i32, %arg1: i32) -> (i32, i32) {
    %c0_i32 = arith.constant 0 : i32
    return %arg0, %arg1 : i32, i32
  }
}

</mosaic_0001>

<llo_original>
// kernel: _am_softmax_call.1
$region0: #{_am_softmax_call.1}
  #allocation0 [shape = 'u32[]', space=smem, size = 0x4, offset = 0x4, fixed_abs, tag = 'smem constant byte address 0x4 - core index']
  #allocation1 [shape = 'u32[72,128]{1,0:T(1,128)}', space=vmem, size = 0x9000, scoped, tag = 'internal scratch']
  %s0 = inlined_call_operand.vmem [shape: bf16[8,32], index: 0, kind: input, shape index: {}]
  %s1 = inlined_call_operand.vmem [shape: bf16[32,128], index: 1, kind: input, shape index: {}]
  %s2 = inlined_call_operand.vmem [shape: f32[8,1], index: 2, kind: input, shape index: {}]
  %s3 = inlined_call_operand.vmem [shape: f32[1,128], index: 3, kind: input, shape index: {}]
  %s4 = inlined_call_operand.hbm [shape: f32[8,128], index: 4, kind: output, shape index: {}]
  %s5 = sld [smem:[#allocation0]]
  $region26: #{_am_softmax_call.1} parent=0
    _
  %s7 = ssub.s32 1, %s5
  %s8 = scalar_select 0, %s7, %s5
  $region1: #{_am_softmax_call.1} parent=0
    #allocation2 [shape = 'u8[4096]{0}', space=vmem, size = 0x1000, scoped, tag = 'output window, operand 0, single buffered']
    #allocation3 [shape = 's32[1]{0}', space=sflag, size = 0x4, scoped, tag = 'scoped memory for _am_softmax_call.1']
    %9 = vsyncpa [#allocation3], 0
    // Predicated region
    $region2: #{_am_softmax_call.1} parent=1 // pred_check
      _
    $region3: #{_am_softmax_call.1} parent=1 // pred_check_branch
      %11 = sbr.rel (0) target = $region5
    $region4: #{_am_softmax_call.1} parent=1 // pred_region
      _
    $region5: #{_am_softmax_call.1} parent=1 // pred_fallthru
      _
    // Predicated region
    $region6: #{_am_softmax_call.1} parent=1 // pred_check
      _
    $region7: #{_am_softmax_call.1} parent=1 // pred_check_branch
      %13 = sbr.rel (0) target = $region9
    $region8: #{_am_softmax_call.1} parent=1 // pred_region
      _
    $region9: #{_am_softmax_call.1} parent=1 // pred_fallthru
      _
    // Predicated region
    $region10: #{_am_softmax_call.1} parent=1 // pred_check
      _
    $region11: #{_am_softmax_call.1} parent=1 // pred_check_branch
      %15 = sbr.rel (0) target = $region13
    $region12: #{_am_softmax_call.1} parent=1 // pred_region
      _
    $region13: #{_am_softmax_call.1} parent=1 // pred_fallthru
      _
    // Predicated region
    $region14: #{_am_softmax_call.1} parent=1 // pred_check
      _
    $region15: #{_am_softmax_call.1} parent=1 // pred_check_branch
      %17 = sbr.rel (0) target = $region17
    $region16: #{_am_softmax_call.1} parent=1 // pred_region
      _
    $region17: #{_am_softmax_call.1} parent=1 // pred_fallthru
      _
    %v19 = vld [vmem:[%s0] sm:$0xf]
    %v20 = vld [vmem:[%s1] sm:$0xf]
    %v21 = vld [vmem:[%s1 + $0x4] sm:$0xf]
    %v22 = vld [vmem:[%s1 + $0x8] sm:$0xf]
    %v23 = vld [vmem:[%s1 + $0xc] sm:$0xf]
    %v28 = vunpack.c.l.b16 %v20
    %v29 = vunpack.c.l.b16 %v21
    %v30 = vunpack.c.l.b16 %v22
    %v31 = vunpack.c.l.b16 %v23
    %v32 = vpack.c.b16 %v29, %v28
    %v33 = vpack.c.b16 %v31, %v30
    %vm36 = vcmask 261120
    %v38 = vsel %vm36, %v19, 0
    %40 = vmatpush.bf16.msra.mxu0 0
    %41 = vmatpush.bf16.msra.mxu0 0
    %42 = vmatpush.bf16.msra.mxu0 0
    %43 = vmatpush.bf16.msra.mxu0 0
    %44 = vmatpush.bf16.msra.mxu0 0
    %45 = vmatpush.bf16.msra.mxu0 0
    %46 = vmatpush.bf16.msra.mxu0 %v33
    %47 = vmatpush.bf16.msra.mxu0 %v32
    %48 = vmatmul.bf16.gmra.mxu0 %v38
    %v49 = vpop.f32.mrf.mxu0
    %v50 = vadd.f32 0.0, %v49
    %v51 = vpop.f32.mrf.mxu0
    %52 = vdwg.mxu0
    %v53 = vld [vmem:[%s2] sm:$0xff]
    %55 = vset.pattern.permute.xlu0 0
    %56 = vperm.xlu0 %55, %v53
    %v57 = vpop.permute.xlu0 %56
    %v59 = vmul.f32 %v50, %v57
    %v60 = vld [vmem:[%s3] sm:$0x1]
    %v62 = vperm.slane %v60, 0
    %v64 = vmul.f32 %v59, %v62
    %65 = vst [vmem:[#allocation2] sm:$0xff] %v64
    // Predicated region
    $region18: #{_am_softmax_call.1} parent=1 // pred_check
      _
    $region19: #{_am_softmax_call.1} parent=1 // pred_check_branch
      %67 = sbr.rel (0) target = $region21
    $region20: #{_am_softmax_call.1} parent=1 // pred_region
      %69 = vsyncadd [#allocation3], 0
      %s71 = sshll.u32 [#allocation2], 4
      %s72 = int_to_ptr.vmem [resolvable:$true] %s71
      %s73 = sshll.u32 %s4, 4
      %s74 = int_to_ptr.hbm [resolvable:$true] %s73
      %76 = dma.vmem_to_hbm [thread:$0]  %s72, 128, %s74, [#allocation3]
    $region21: #{_am_softmax_call.1} parent=1 // pred_fallthru
      _
    // Predicated region
    $region22: #{_am_softmax_call.1} parent=1 // pred_check
      _
    $region23: #{_am_softmax_call.1} parent=1 // pred_check_branch
      %78 = sbr.rel (0) target = $region25
    $region24: #{_am_softmax_call.1} parent=1 // pred_region
      %80 = dma.done [#allocation3], 128
    $region25: #{_am_softmax_call.1} parent=1 // pred_fallthru
      _
    %81 = vsyncpa [#allocation3], 1

</llo_original>
